<compile_context>
chip_gen: v5e
topology: v5e:2x2
jax: 0.10.0
libtpu: 0.0.40
codegen_flags: <defaults>
</compile_context>

<pallas_src>
import functools

import jax
import jax.numpy as jnp
from jax import lax
from jax.experimental import pallas as pl
from jax.experimental.pallas import tpu as pltpu


HP = 128  # lane-dense padded width for h_aug / the kernel output (multiple of 128)


# ---------------------------------------------------------------------------
# Kernels
# ---------------------------------------------------------------------------
def gat_project_kernel(x_ref, rhs_ref, wa2_ref, haug_ref, f1_ref, f2row_ref,
                       *, out_f, mxu_dtype):
    xm = x_ref[...].astype(mxu_dtype)                                     # (tm, in_f)
    # proj columns: [0:out_f] = h = x@W ; [out_f] = 0 (becomes the ones column);
    #               [out_f+1] = f1 = x@(W@a1) ; rest zero padding to 128 lanes.
    proj = jnp.dot(xm, rhs_ref[...], preferred_element_type=jnp.float32)  # (tm, 128)
    f1_ref[...] = proj[:, out_f + 1:out_f + 2]                            # (tm, 1) f32

    # f2 row (1, tm): contract (W@a2)ᵀ against xᵀ on the MXU (A @ Bᵀ), so the
    # key-side logits are produced directly in row layout — no relayout needed
    # here or in the wrapper.
    f2row_ref[...] = lax.dot_general(
        wa2_ref[...], xm,
        dimension_numbers=(((1,), (1,)), ((), ())),
        preferred_element_type=jnp.float32)

    # h_aug = [h | 1 | leftovers] in bf16.  The ones column folds the softmax
    # row-sum into the phase-2 MXU dot; the leftover f1/pad columns only land
    # in output columns the wrapper slices away.
    col = lax.broadcasted_iota(jnp.int32, proj.shape, 1)
    haug_ref[...] = jnp.where(col == out_f, 1.0, proj).astype(mxu_dtype)


def gat_attention_kernel(haug_ref, f1_ref, f2_ref, adj_ref, out_ref,
                         *, alpha, out_f, exp_dtype, mxu_dtype):
    # e[i, j] = LeakyReLU(f1[i] + f2[j]) for this row tile.          (tm, N)
    e = f1_ref[...] + f2_ref[...]
    e = jnp.maximum(e, alpha * e)                 # LeakyReLU (valid for 0<=alpha<=1)

    # Adjacency mask: compare int8 directly (boolean mask, no f32 unpack).
    att = jnp.where(adj_ref[...] > 0, e, -9000000000000000.0)

    # Row softmax (dim=1); each tile holds full rows, so no cross-tile state.
    m = jnp.max(att, axis=1, keepdims=True)
    p = jnp.exp((att - m).astype(exp_dtype)).astype(mxu_dtype)

    # One MXU dot yields both the unnormalized h' (cols [0:out_f]) and the
    # softmax row-sum (col out_f, via the ones column of h_aug).
    hp_aug = jnp.dot(p, haug_ref[...], preferred_element_type=jnp.float32)  # (tm, 128)
    s = hp_aug[:, out_f:out_f + 1]
    hp = hp_aug * pl.reciprocal(s, approx=True)

    # concat=True -> ELU; exp only evaluated on the non-positive branch.
    out_ref[...] = jnp.where(hp > 0, hp, jnp.exp(jnp.minimum(hp, 0.0)) - 1.0)


# ---------------------------------------------------------------------------
# Wrapper helpers
# ---------------------------------------------------------------------------
def _tpu_vmem_capacity_bytes():
    try:
        return int(pltpu.get_tpu_info().vmem_capacity_bytes)
    except Exception:
        return 64 << 20  # conservative default (v7x physical VMEM)


def _exp_dtype_for_device():
    # bf16 EUP/VPU path exists on v6e/v7x; keep elementwise math in f32 on
    # v5e and older (no bf16 EUP/VPU).
    try:
        kind = jax.devices()[0].device_kind.lower()
    except Exception:
        return jnp.float32
    if any(t in kind for t in ("v2", "v3", "v4", "v5")):
        return jnp.float32
    return jnp.bfloat16


def _phase2_tile_bytes(tm, n):
    return (2 * tm * n              # adj tile, int8, double-buffered
            + 2 * n * HP * 2        # h_aug (bf16, resident)
            + 2 * n * 4             # f2 row (resident)
            + 2 * tm * 4            # f1 tile
            + 2 * tm * HP * 4       # output tile (f32), double-buffered
            + 6 * tm * n * 4)       # e / att / p temporaries (f32)


def _pick_tile_m(n, vmem_cap):
    # tm must be a multiple of 128 (f2-row lane blocks) or the full extent.
    if n <= 128:
        return n  # single block; grid=1 is unavoidable (and cheap) at tiny N
    if (vmem_cap >= (96 << 20) and n % 256 == 0 and n // 256 >= 2
            and _phase2_tile_bytes(256, n) < 0.4 * vmem_cap):
        return 256  # big tiles on 128-MiB parts (v5e/v6e) amortize step cost
    return 128      # keeps the row grid >= 2 so both v7x TensorCores are busy


# ---------------------------------------------------------------------------
# Wrapper
# ---------------------------------------------------------------------------
def gat_forward(x, W, a, adj, *, alpha=0.2, mxu_dtype=jnp.bfloat16,
                tile_m=None, exp_dtype=None):
    N, in_f = x.shape
    out_f = W.shape[1]
    assert adj.shape == (N, N)
    assert out_f + 2 <= HP
    assert 0.0 <= alpha <= 1.0  # LeakyReLU implemented via maximum(e, alpha*e)

    vmem_cap = _tpu_vmem_capacity_bytes()
    if exp_dtype is None:
        exp_dtype = _exp_dtype_for_device()
    tm = _pick_tile_m(N, vmem_cap) if tile_m is None else tile_m
    grid = (pl.cdiv(N, tm),)

    vmem_limit = int(min(max(_phase2_tile_bytes(tm, N) + (16 << 20), 32 << 20),
                         int(0.85 * vmem_cap)))
    cparams = pltpu.CompilerParams(
        dimension_semantics=("parallel",),
        vmem_limit_bytes=vmem_limit,
    )

    # Adjacency only feeds a `> 0` test: stream it as int8.  Use compare-then-
    # cast (not a value cast) so weighted float adjacency keeps `adj > 0`
    # semantics.  Callers that reuse adj across layers should pass int8/bool
    # to avoid this N^2 conversion pass per call (the test below does).
    if adj.dtype == jnp.int8 or adj.dtype == jnp.bool_:
        adj_i8 = adj.astype(jnp.int8)
    else:
        adj_i8 = (adj > 0).astype(jnp.int8)

    # Tiny parameter prep (built once, in f32, then cast to the MXU dtype).
    wa1 = W @ a[:out_f, :]                         # (in_f, 1)
    wa2 = W @ a[out_f:, :]                         # (in_f, 1)
    rhs = jnp.zeros((in_f, HP), jnp.float32)
    rhs = rhs.at[:, :out_f].set(W).at[:, out_f + 1:out_f + 2].set(wa1)
    rhs = rhs.astype(mxu_dtype)                    # (in_f, 128)
    wa2_row = wa2.T.astype(mxu_dtype)              # (1, in_f)

    # Phase 1: [h_aug | f1 | f2row] = projections of x  (row-tiled, parallel).
    haug, f1, f2row = pl.pallas_call(
        functools.partial(gat_project_kernel, out_f=out_f, mxu_dtype=mxu_dtype),
        out_shape=(
            jax.ShapeDtypeStruct((N, HP), mxu_dtype),
            jax.ShapeDtypeStruct((N, 1), jnp.float32),
            jax.ShapeDtypeStruct((1, N), jnp.float32),
        ),
        grid=grid,
        in_specs=[
            pl.BlockSpec((tm, in_f), lambda i: (i, 0)),   # x row tile
            pl.BlockSpec((in_f, HP), lambda i: (0, 0)),   # [W | 0 | W@a1 | pad]
            pl.BlockSpec((1, in_f), lambda i: (0, 0)),    # (W@a2)^T row
        ],
        out_specs=(
            pl.BlockSpec((tm, HP), lambda i: (i, 0)),     # h_aug (lane-dense)
            pl.BlockSpec((tm, 1), lambda i: (i, 0)),      # f1
            pl.BlockSpec((1, tm), lambda i: (0, i)),      # f2 row
        ),
        compiler_params=cparams,
    )(x, rhs, wa2_row)

    # Phase 2: masked row softmax + att @ h_aug + ELU   (row-tiled, parallel).
    out_pad = pl.pallas_call(
        functools.partial(gat_attention_kernel, alpha=alpha, out_f=out_f,
                          exp_dtype=exp_dtype, mxu_dtype=mxu_dtype),
        out_shape=jax.ShapeDtypeStruct((N, HP), jnp.float32),
        grid=grid,
        in_specs=[
            pl.BlockSpec((N, HP), lambda i: (0, 0)),      # h_aug (resident, bf16)
            pl.BlockSpec((tm, 1), lambda i: (i, 0)),      # f1 (row tile)
            pl.BlockSpec((1, N), lambda i: (0, 0)),       # f2 row (resident)
            pl.BlockSpec((tm, N), lambda i: (i, 0)),      # adj (row tile, int8)
        ],
        out_specs=pl.BlockSpec((tm, HP), lambda i: (i, 0)),  # lane-dense slab
        compiler_params=cparams,
    )(haug, f1, f2row, adj_i8)

    # Single-head layer: only out_f columns are meaningful; the kernel stores a
    # lane-dense 128-wide block (unmasked vst) and we slice here.
    return out_pad[:, :out_f]


# ---------------------------------------------------------------------------
# References
# ---------------------------------------------------------------------------
def gat_reference(x, W, a, adj, *, alpha=0.2):
    """Pure-JAX f32 reference mirroring the PyTorch forward (eval mode)."""
    h = x @ W
    out_f = W.shape[1]
    f1 = h @ a[:out_f, :]
    f2 = h @ a[out_f:, :]
    e = f1 + f2.T
    e = jnp.where(e > 0, e, alpha * e)
    att = jnp.where(adj > 0, e, jnp.full_like(e, -9000000000000000.0))
    att = jax.nn.softmax(att, axis=1)
    hp = att @ h
    return jnp.where(hp > 0, hp, jnp.exp(hp) - 1.0)


def gat_reference_mxu_matched(x, W, a, adj, *, alpha=0.2,
                              mxu_dtype=jnp.bfloat16, exp_dtype=jnp.float32):
    """Same math with the kernel's dtype policy (bf16 MXU operands, f32 acc)."""
    out_f = W.shape[1]
    wa1 = (W @ a[:out_f, :]).astype(mxu_dtype)
    wa2 = (W @ a[out_f:, :]).astype(mxu_dtype)
    xm = x.astype(mxu_dtype)
    h = jnp.dot(xm, W.astype(mxu_dtype), preferred_element_type=jnp.float32)
    f1 = jnp.dot(xm, wa1, preferred_element_type=jnp.float32)
    f2 = jnp.dot(xm, wa2, preferred_element_type=jnp.float32)
    e = f1 + f2.T
    e = jnp.maximum(e, alpha * e)
    att = jnp.where(adj > 0, e, -9000000000000000.0)
    m = jnp.max(att, axis=1, keepdims=True)
    p = jnp.exp((att - m).astype(exp_dtype)).astype(mxu_dtype)
    s = jnp.sum(p.astype(jnp.float32), axis=1, keepdims=True)
    hp = jnp.dot(p, h.astype(mxu_dtype), preferred_element_type=jnp.float32) / s
    return jnp.where(hp > 0, hp, jnp.exp(jnp.minimum(hp, 0.0)) - 1.0)


def xavier_uniform(key, shape, gain):
    fan_in, fan_out = shape[0], shape[1]
    bound = gain * jnp.sqrt(6.0 / (fan_in + fan_out))
    return jax.random.uniform(key, shape, jnp.float32, -bound, bound)


if __name__ == "__main__":
    # Small, module-consistent shapes; N=256 with tm=128 exercises grid=(2,).
    N, in_features, out_features = 256, 64, 32
    alpha = 0.2  # LeakyReLU negative slope

    key = jax.random.PRNGKey(0)
    kx, kadj, kw, ka = jax.random.split(key, 4)

    x = jax.random.normal(kx, (N, in_features), jnp.float32)

    # Sparse-ish symmetric adjacency with self loops, values in {0,1}, stored
    # persistently as int8 (no per-call N^2 conversion pass).
    adj = (jax.random.uniform(kadj, (N, N)) < 0.05).astype(jnp.int8)
    adj = jnp.maximum(adj, adj.T)
    adj = jnp.maximum(adj, jnp.eye(N, dtype=jnp.int8))

    # Deterministic parameter init (same shapes / init scheme as the module).
    W = xavier_uniform(kw, (in_features, out_features), gain=1.414)
    a = xavier_uniform(ka, (2 * out_features, 1), gain=1.414)

    exp_dtype = _exp_dtype_for_device()

    out = gat_forward(x, W, a, adj, alpha=alpha, exp_dtype=exp_dtype)
    out = jax.block_until_ready(out)
    assert out.shape == (N, out_features)
    assert bool(jnp.all(jnp.isfinite(out)))

    # Tight check vs a reference using the kernel's dtype policy (tolerance also
    # absorbs the approximate-reciprocal softmax normalization).
    ref_matched = gat_reference_mxu_matched(x, W, a, adj, alpha=alpha,
                                            exp_dtype=exp_dtype)
    assert jnp.allclose(out, ref_matched, rtol=2e-2, atol=2e-2), \
        "mismatch vs precision-matched reference"

    # Loose sanity check vs the full-f32 PyTorch-order reference (bf16 MXU
    # operands / bf16 exp introduce small post-softmax differences).
    ref_f32 = gat_reference(x, W, a, adj, alpha=alpha)
    assert jnp.allclose(out, ref_f32, rtol=5e-2, atol=2.5e-1), \
        "mismatch vs f32 reference"

    print("KERNEL_OK")
</pallas_src>

<mosaic_0001>
module attributes {stable_mosaic.version = 11 : i64} {
  func.func @gat_project_kernel(%arg0: i32, %arg1: memref<128x64xf32, #tpu.memory_space<vmem>>, %arg2: memref<64x128xbf16, #tpu.memory_space<vmem>>, %arg3: memref<1x64xbf16, #tpu.memory_space<vmem>>, %arg4: memref<128x128xbf16, #tpu.memory_space<vmem>>, %arg5: memref<128x1xf32, #tpu.memory_space<vmem>>, %arg6: memref<1x128xf32, #tpu.memory_space<vmem>>) attributes {dimension_semantics = [#tpu.dimension_semantics<parallel>], iteration_bounds = array<i64: 2>, scalar_prefetch = 0 : i64, scratch_operands = 0 : i64, tpu.core_type = #tpu.core_type<tc>, window_params = [{transform_indices = @transform_0, window_bounds = array<i64: 128, 64>}, {pipeline_mode = #tpu.pipeline_mode<synchronous>, transform_indices = @transform_1, window_bounds = array<i64: 64, 128>}, {pipeline_mode = #tpu.pipeline_mode<synchronous>, transform_indices = @transform_2, window_bounds = array<i64: 1, 64>}, {transform_indices = @transform_3, window_bounds = array<i64: 128, 128>}, {transform_indices = @transform_4, window_bounds = array<i64: 128, 1>}, {transform_indices = @transform_5, window_bounds = array<i64: 1, 128>}]} {
    %c0 = arith.constant 0 : index
    %c0_0 = arith.constant 0 : index
    %0 = vector.load %arg1[%c0, %c0_0] : memref<128x64xf32, #tpu.memory_space<vmem>>, vector<128x64xf32>
    %1 = arith.truncf %0 : vector<128x64xf32> to vector<128x64xbf16>
    %c0_1 = arith.constant 0 : index
    %c0_2 = arith.constant 0 : index
    %2 = vector.load %arg2[%c0_1, %c0_2] : memref<64x128xbf16, #tpu.memory_space<vmem>>, vector<64x128xbf16>
    %cst = arith.constant dense<0.000000e+00> : vector<128x128xf32>
    %3 = tpu.matmul %1, %2, %cst {dimension_numbers = #tpu.dot_dimension_numbers<[1], [0], [0], [1], [0, 0, 1, 1], [], []>} : vector<128x64xbf16>, vector<64x128xbf16>, vector<128x128xf32> -> vector<128x128xf32>
    %4 = vector.extract_strided_slice %3 {offsets = [0, 33], sizes = [128, 1], strides = [1, 1]} : vector<128x128xf32> to vector<128x1xf32>
    %c0_3 = arith.constant 0 : index
    %c0_4 = arith.constant 0 : index
    %5 = vector.load %arg5[%c0_3, %c0_4] : memref<128x1xf32, #tpu.memory_space<vmem>>, vector<128x1xf32>
    tpu.vector_store %arg5[%c0_3, %c0_4], %4 {strides = array<i32>} : memref<128x1xf32, #tpu.memory_space<vmem>>, vector<128x1xf32>,
    %c0_5 = arith.constant 0 : index
    %c0_6 = arith.constant 0 : index
    %6 = vector.load %arg3[%c0_5, %c0_6] : memref<1x64xbf16, #tpu.memory_space<vmem>>, vector<1x64xbf16>
    %cst_7 = arith.constant dense<0.000000e+00> : vector<1x128xf32>
    %7 = tpu.matmul %6, %1, %cst_7 {dimension_numbers = #tpu.dot_dimension_numbers<[1], [1], [0], [0], [0, 0, 1, 0], [], []>} : vector<1x64xbf16>, vector<128x64xbf16>, vector<1x128xf32> -> vector<1x128xf32>
    %c0_8 = arith.constant 0 : index
    %c0_9 = arith.constant 0 : index
    %8 = vector.load %arg6[%c0_8, %c0_9] : memref<1x128xf32, #tpu.memory_space<vmem>>, vector<1x128xf32>
    tpu.vector_store %arg6[%c0_8, %c0_9], %7 {strides = array<i32>} : memref<1x128xf32, #tpu.memory_space<vmem>>, vector<1x128xf32>,
    %9 = tpu.iota {dimensions = array<i32: 1>} : vector<128x128xi32>
    %c32_i32 = arith.constant 32 : i32
    %10 = vector.broadcast %c32_i32 : i32 to vector<128x128xi32>
    %11 = arith.cmpi eq, %9, %10 : vector<128x128xi32>
    %cst_10 = arith.constant 1.000000e+00 : f32
    %12 = vector.broadcast %cst_10 : f32 to vector<128x128xf32>
    %13 = arith.select %11, %12, %3 : vector<128x128xi1>, vector<128x128xf32>
    %14 = arith.truncf %13 : vector<128x128xf32> to vector<128x128xbf16>
    %c0_11 = arith.constant 0 : index
    %c0_12 = arith.constant 0 : index
    %15 = vector.load %arg4[%c0_11, %c0_12] : memref<128x128xbf16, #tpu.memory_space<vmem>>, vector<128x128xbf16>
    tpu.vector_store %arg4[%c0_11, %c0_12], %14 {strides = array<i32>} : memref<128x128xbf16, #tpu.memory_space<vmem>>, vector<128x128xbf16>,
    return
  }
  func.func @transform_0(%arg0: i32) -> (i32, i32) {
    %c0_i32 = arith.constant 0 : i32
    %c0_i32_0 = arith.constant 0 : i32
    return %arg0, %c0_i32 : i32, i32
  }
  func.func @transform_1(%arg0: i32) -> (i32, i32) {
    %c0_i32 = arith.constant 0 : i32
    %c0_i32_0 = arith.constant 0 : i32
    %c0_i32_1 = arith.constant 0 : i32
    return %c0_i32, %c0_i32_0 : i32, i32
  }
  func.func @transform_2(%arg0: i32) -> (i32, i32) {
    %c0_i32 = arith.constant 0 : i32
    %c0_i32_0 = arith.constant 0 : i32
    %c0_i32_1 = arith.constant 0 : i32
    return %c0_i32, %c0_i32_0 : i32, i32
  }
  func.func @transform_3(%arg0: i32) -> (i32, i32) {
    %c0_i32 = arith.constant 0 : i32
    %c0_i32_0 = arith.constant 0 : i32
    return %arg0, %c0_i32 : i32, i32
  }
  func.func @transform_4(%arg0: i32) -> (i32, i32) {
    %c0_i32 = arith.constant 0 : i32
    %c0_i32_0 = arith.constant 0 : i32
    return %arg0, %c0_i32 : i32, i32
  }
  func.func @transform_5(%arg0: i32) -> (i32, i32) {
    %c0_i32 = arith.constant 0 : i32
    %c0_i32_0 = arith.constant 0 : i32
    return %c0_i32, %arg0 : i32, i32
  }
}

</mosaic_0001>

<llo_original>
// kernel: tpu_custom_call.1
$region0: #{tpu_custom_call.1}
  #allocation0 [shape = 'u32[]', space=smem, size = 0x4, offset = 0x4, fixed_abs, tag = 'smem constant byte address 0x4 - core index']
  #allocation1 [shape = 'u32[72,128]{1,0:T(1,128)}', space=vmem, size = 0x9000, scoped, tag = 'internal scratch']
  %s0 = inlined_call_operand.vmem [shape: f32[256,64], index: 0, kind: input, shape index: {}]
  %s1 = inlined_call_operand.vmem [shape: bf16[64,128], index: 1, kind: input, shape index: {}]
  %s2 = inlined_call_operand.vmem [shape: bf16[1,64], index: 2, kind: input, shape index: {}]
  %s3 = inlined_call_operand.hbm [shape: bf16[256,128], index: 3, kind: output, shape index: {0}]
  %s4 = inlined_call_operand.vmem [shape: f32[256,1], index: 4, kind: output, shape index: {1}]
  %s5 = inlined_call_operand.hbm [shape: f32[1,256], index: 5, kind: output, shape index: {2}]
  %6 = xla_tuple %s3, %s4, %s5
  %s7 = sld [smem:[#allocation0]]
  $region61: #{tpu_custom_call.1} parent=0
    _
  %s9 = ssub.s32 1, %s7
  %s10 = scalar_select 0, %s9, %s7
  $region1: #{tpu_custom_call.1} parent=0
    #allocation2 [shape = 'u8[65536]{0}', space=vmem, size = 0x10000, scoped, tag = 'output window, operand 0']
    #allocation3 [shape = 's32[2]{0}', space=sflag, size = 0x8, scoped, tag = 'scoped memory for tpu_custom_call.1']
    #allocation4 [shape = 'u8[1024]{0}', space=vmem, size = 0x400, scoped, tag = 'output window, operand 2']
    #allocation5 [shape = 's32[2]{0}', space=sflag, size = 0x8, scoped, tag = 'scoped memory for tpu_custom_call.1']
    %11 = vsyncpa [#allocation3], 0
    %s12 = scalar_lea.sflag [#allocation3], 1
    %13 = vsyncpa %s12, 0
    %14 = vsyncpa [#allocation5], 0
    %s15 = scalar_lea.sflag [#allocation5], 1
    %16 = vsyncpa %s15, 0
    loop: start=0, step=1, limit=4
    $region2: #{tpu_custom_call.1} parent=1 // loop_pre_header
      _
    $region3: #{tpu_custom_call.1} parent=1 // loop_header
      %s18 = sphi 0, %s22
      %p19 = scmp.ge.s32.totalorder %s18, 4
      %s28 = sphi 0, %s30
      %s31 = sphi 0, %s28
      %s32 = sphi 0, %s31
      %s48 = sphi 0, %s32
      %s52 = sphi 0, %s52
      %s54 = sphi 0, %s52
      %s55 = sphi 0, %s54
      %s69 = sphi 0, %s55
      %s73 = sphi 0, %s73
      %s75 = sphi 0, %s73
      %s76 = sphi 0, %s75
      %s90 = sphi 0, %s76
      %s96 = sphi 0, %s98
      %s99 = sphi 0, %s96
      %s100 = sphi 0, %s99
      %s116 = sphi 0, %s100
      %s122 = sphi 0, %s124
      %s125 = sphi 0, %s122
      %s126 = sphi 0, %s125
      %s142 = sphi 0, %s126
      %s148 = sphi 0, %s150
      %s151 = sphi 0, %s148
      %s152 = sphi 0, %s151
      %s168 = sphi 0, %s152
    $region4: #{tpu_custom_call.1} parent=1 // loop_header_branch
      %21 = sbr.rel (%p19) target = $region8
    $region5: #{tpu_custom_call.1} parent=1 // loop_body
      %s23 = ssub.s32 %s18, 1
      %s24 = ssub.s32 %s18, 2
      %s25 = sadd.s32 %s18, 1
      %s26 = ssub.s32 %s18, %s25
      %p27 = scmp.eq.s32.totalorder %s26, 0
      %s29 = sadd.s32 %s28, 1
      %s30 = scalar_select %p27, %s28, %s29
      %p33 = pneg %p27
      %p34 = scmp.eq.s32.totalorder %s18, 1
      %p35 = por %p33, %p34
      %p36 = scmp.ne.s32.totalorder %s28, %s31
      %p37 = scmp.eq.s32.totalorder %s18, 0
      %p38 = por %p36, %p37
      %p39 = scmp.ne.s32.totalorder %s28, %s31
      %p40 = scmp.eq.s32.totalorder %s23, 1
      %p41 = por %p39, %p40
      %p42 = scmp.ne.s32.totalorder %s31, %s32
      %p43 = scmp.eq.s32.totalorder %s23, 0
      %p44 = por %p42, %p43
      %p45 = scmp.ne.s32.totalorder %s31, %s32
      %p46 = scmp.eq.s32.totalorder %s24, 1
      %p47 = por %p45, %p46
      %p49 = scmp.ne.s32.totalorder %s32, %s48
      %p50 = scmp.eq.s32.totalorder %s24, 0
      %p51 = por %p49, %p50
      %s53 = sadd.s32 %s52, 1
      %p56 = scmp.eq.s32.totalorder %s18, 1
      %p57 = scmp.ne.s32.totalorder %s52, %s54
      %p58 = scmp.eq.s32.totalorder %s18, 0
      %p59 = por %p57, %p58
      %p60 = scmp.ne.s32.totalorder %s52, %s54
      %p61 = scmp.eq.s32.totalorder %s23, 1
      %p62 = por %p60, %p61
      %p63 = scmp.ne.s32.totalorder %s54, %s55
      %p64 = scmp.eq.s32.totalorder %s23, 0
      %p65 = por %p63, %p64
      %p66 = scmp.ne.s32.totalorder %s54, %s55
      %p67 = scmp.eq.s32.totalorder %s24, 1
      %p68 = por %p66, %p67
      %p70 = scmp.ne.s32.totalorder %s55, %s69
      %p71 = scmp.eq.s32.totalorder %s24, 0
      %p72 = por %p70, %p71
      %s74 = sadd.s32 %s73, 1
      %p77 = scmp.eq.s32.totalorder %s18, 1
      %p78 = scmp.ne.s32.totalorder %s73, %s75
      %p79 = scmp.eq.s32.totalorder %s18, 0
      %p80 = por %p78, %p79
      %p81 = scmp.ne.s32.totalorder %s73, %s75
      %p82 = scmp.eq.s32.totalorder %s23, 1
      %p83 = por %p81, %p82
      %p84 = scmp.ne.s32.totalorder %s75, %s76
      %p85 = scmp.eq.s32.totalorder %s23, 0
      %p86 = por %p84, %p85
      %p87 = scmp.ne.s32.totalorder %s75, %s76
      %p88 = scmp.eq.s32.totalorder %s24, 1
      %p89 = por %p87, %p88
      %p91 = scmp.ne.s32.totalorder %s76, %s90
      %p92 = scmp.eq.s32.totalorder %s24, 0
      %p93 = por %p91, %p92
      %s94 = ssub.s32 %s18, %s25
      %p95 = scmp.eq.s32.totalorder %s94, 0
      %s97 = sadd.s32 %s96, 1
      %s98 = scalar_select %p95, %s96, %s97
      %p101 = pneg %p95
      %p102 = scmp.eq.s32.totalorder %s18, 1
      %p103 = por %p101, %p102
      %p104 = scmp.ne.s32.totalorder %s96, %s99
      %p105 = scmp.eq.s32.totalorder %s18, 0
      %p106 = por %p104, %p105
      %p107 = scmp.ne.s32.totalorder %s96, %s99
      %p108 = scmp.eq.s32.totalorder %s23, 1
      %p109 = por %p107, %p108
      %p110 = scmp.ne.s32.totalorder %s99, %s100
      %p111 = scmp.eq.s32.totalorder %s23, 0
      %p112 = por %p110, %p111
      %p113 = scmp.ne.s32.totalorder %s99, %s100
      %p114 = scmp.eq.s32.totalorder %s24, 1
      %p115 = por %p113, %p114
      %p117 = scmp.ne.s32.totalorder %s100, %s116
      %p118 = scmp.eq.s32.totalorder %s24, 0
      %p119 = por %p117, %p118
      %s120 = ssub.s32 %s18, %s25
      %p121 = scmp.eq.s32.totalorder %s120, 0
      %s123 = sadd.s32 %s122, 1
      %s124 = scalar_select %p121, %s122, %s123
      %p127 = pneg %p121
      %p128 = scmp.eq.s32.totalorder %s18, 1
      %p129 = por %p127, %p128
      %p130 = scmp.ne.s32.totalorder %s122, %s125
      %p131 = scmp.eq.s32.totalorder %s18, 0
      %p132 = por %p130, %p131
      %p133 = scmp.ne.s32.totalorder %s122, %s125
      %p134 = scmp.eq.s32.totalorder %s23, 1
      %p135 = por %p133, %p134
      %p136 = scmp.ne.s32.totalorder %s125, %s126
      %p137 = scmp.eq.s32.totalorder %s23, 0
      %p138 = por %p136, %p137
      %p139 = scmp.ne.s32.totalorder %s125, %s126
      %p140 = scmp.eq.s32.totalorder %s24, 1
      %p141 = por %p139, %p140
      %p143 = scmp.ne.s32.totalorder %s126, %s142
      %p144 = scmp.eq.s32.totalorder %s24, 0
      %p145 = por %p143, %p144
      %s146 = ssub.s32 %s18, %s25
      %p147 = scmp.eq.s32.totalorder %s146, 0
      %s149 = sadd.s32 %s148, 1
      %s150 = scalar_select %p147, %s148, %s149
      %p153 = pneg %p147
      %p154 = scmp.eq.s32.totalorder %s18, 1
      %p155 = por %p153, %p154
      %p156 = scmp.ne.s32.totalorder %s148, %s151
      %p157 = scmp.eq.s32.totalorder %s18, 0
      %p158 = por %p156, %p157
      %p159 = scmp.ne.s32.totalorder %s148, %s151
      %p160 = scmp.eq.s32.totalorder %s23, 1
      %p161 = por %p159, %p160
      %p162 = scmp.ne.s32.totalorder %s151, %s152
      %p163 = scmp.eq.s32.totalorder %s23, 0
      %p164 = por %p162, %p163
      %p165 = scmp.ne.s32.totalorder %s151, %s152
      %p166 = scmp.eq.s32.totalorder %s24, 1
      %p167 = por %p165, %p166
      %p169 = scmp.ne.s32.totalorder %s152, %s168
      %p170 = scmp.eq.s32.totalorder %s24, 0
      %p171 = por %p169, %p170
      %p172 = scmp.le.s32.totalorder 1, %s18
      %p173 = scmp.lt.s32.totalorder %s18, 3
      %p174 = pnand %p172, %p173
      %p175 = pneg %p174
      // Predicated region
      $region9: #{tpu_custom_call.1} parent=5 // pred_check
        _
      $region10: #{tpu_custom_call.1} parent=5 // pred_check_branch
        %177 = sbr.rel (%p174) target = $region12
      $region11: #{tpu_custom_call.1} parent=5 // pred_region
        %s178 = ssub.s32 %s18, 1
        // Predicated region
        $region13: #{tpu_custom_call.1} parent=11 // pred_check
          %p179 = pneg %p65
        $region14: #{tpu_custom_call.1} parent=11 // pred_check_branch
          %181 = sbr.rel (%p179) target = $region16
        $region15: #{tpu_custom_call.1} parent=11 // pred_region
          _
        $region16: #{tpu_custom_call.1} parent=11 // pred_fallthru
          _
        // Predicated region
        $region17: #{tpu_custom_call.1} parent=11 // pred_check
          %p182 = pneg %p86
        $region18: #{tpu_custom_call.1} parent=11 // pred_check_branch
          %184 = sbr.rel (%p182) target = $region20
        $region19: #{tpu_custom_call.1} parent=11 // pred_region
          _
        $region20: #{tpu_custom_call.1} parent=11 // pred_fallthru
          _
      $region12: #{tpu_custom_call.1} parent=5 // pred_fallthru
        _
      %p185 = scmp.lt.s32.totalorder %s18, 2
      // Predicated region
      $region21: #{tpu_custom_call.1} parent=5 // pred_check
        %p186 = pneg %p185
      $region22: #{tpu_custom_call.1} parent=5 // pred_check_branch
        %188 = sbr.rel (%p186) target = $region24
      $region23: #{tpu_custom_call.1} parent=5 // pred_region
        // Predicated region
        $region25: #{tpu_custom_call.1} parent=23 // pred_check
          %p189 = pneg %p38
        $region26: #{tpu_custom_call.1} parent=23 // pred_check_branch
          %191 = sbr.rel (%p189) target = $region28
        $region27: #{tpu_custom_call.1} parent=23 // pred_region
          %s192 = smul.u32 16, %s18
          %p193 = scmp.lt.s32.totalorder %s192, 31
          %s194 = scalar_select %p193, %s192, 31
          %s195 = smul.addr %s194, 8
          %s196 = scalar_lea.vmem %s0, %s195
          %s197 = smul.u32 16, %s18
        $region28: #{tpu_custom_call.1} parent=23 // pred_fallthru
          _
      $region24: #{tpu_custom_call.1} parent=5 // pred_fallthru
        _
      %p198 = scmp.le.s32.totalorder 1, %s18
      %p199 = scmp.lt.s32.totalorder %s18, 3
      %p200 = pnand %p198, %p199
      %p201 = pneg %p200
      // Predicated region
      $region29: #{tpu_custom_call.1} parent=5 // pred_check
        _
      $region30: #{tpu_custom_call.1} parent=5 // pred_check_branch
        %203 = sbr.rel (%p200) target = $region32
      $region31: #{tpu_custom_call.1} parent=5 // pred_region
        %s204 = ssub.s32 %s18, 1
        %s205 = smul.u32 16, %s23
        %p206 = scmp.lt.s32.totalorder %s205, 31
        %s207 = scalar_select %p206, %s205, 31
        %s208 = smul.addr %s207, 8
        %s209 = scalar_lea.vmem %s0, %s208
        %p210 = pneg %p44
        %p211 = pneg %p41
        %p212 = pneg %p65
        %p213 = pneg %p62
        %p214 = pneg %p86
        %p215 = pneg %p83
        %p216 = pneg %p112
        %p217 = pneg %p109
        %s218 = sand.u32 %s99, 1
        %s219 = scalar_lea.sflag [#allocation3], %s218
        %s220 = sand.u32 %s99, 1
        %s221 = smul.addr %s220, 64
        %s222 = scalar_lea.vmem [#allocation2], %s221
        %p223 = pneg %p138
        %p224 = pneg %p135
        %s225 = smul.u32 16, %s23
        %p226 = scmp.lt.s32.totalorder %s225, 31
        %s227 = scalar_select %p226, %s225, 31
        %s228 = smul.addr %s227, 8
        %s229 = scalar_lea.vmem %s4, %s228
        %p230 = pneg %p164
        %p231 = pneg %p161
        %s232 = sand.u32 %s151, 1
        %s233 = scalar_lea.sflag [#allocation5], %s232
        %s234 = sand.u32 %s151, 1
        %s235 = scalar_lea.vmem [#allocation4], %s234
        %s236 = smul.u32 16, %s23
        %p237 = scmp.lt.s32.totalorder %s236, 31
        %s238 = scalar_select %p237, %s236, 31
        %s239 = smul.addr %s238, 8
        %s240 = scalar_lea.vmem %s0, %s239
        %s241 = smul.u32 16, %s23
        %s242 = smul.u32 16, %s23
        %s243 = smul.u32 16, %s23
        %p244 = scmp.lt.s32.totalorder %s243, 31
        %s245 = scalar_select %p244, %s243, 31
        %s246 = smul.addr %s245, 8
        %s247 = scalar_lea.vmem %s4, %s246
        %s248 = smul.u32 16, %s23
        %v250 = vld [vmem:[%s240] sm:$0xff]
        %v251 = vld [vmem:[%s240 + $0x8] sm:$0xff]
        %v252 = vld [vmem:[%s240 + $0x10] sm:$0xff]
        %v253 = vld [vmem:[%s240 + $0x18] sm:$0xff]
        %v254 = vld [vmem:[%s240 + $0x20] sm:$0xff]
        %v255 = vld [vmem:[%s240 + $0x28] sm:$0xff]
        %v256 = vld [vmem:[%s240 + $0x30] sm:$0xff]
        %v257 = vld [vmem:[%s240 + $0x38] sm:$0xff]
        %v258 = vld [vmem:[%s240 + $0x40] sm:$0xff]
        %v259 = vld [vmem:[%s240 + $0x48] sm:$0xff]
        %v260 = vld [vmem:[%s240 + $0x50] sm:$0xff]
        %v261 = vld [vmem:[%s240 + $0x58] sm:$0xff]
        %v262 = vld [vmem:[%s240 + $0x60] sm:$0xff]
        %v263 = vld [vmem:[%s240 + $0x68] sm:$0xff]
        %v264 = vld [vmem:[%s240 + $0x70] sm:$0xff]
        %v265 = vld [vmem:[%s240 + $0x78] sm:$0xff]
        %v266 = vpack.c.bf16 %v251, %v250
        %v267 = vpack.c.bf16 %v253, %v252
        %v268 = vpack.c.bf16 %v255, %v254
        %v269 = vpack.c.bf16 %v257, %v256
        %v270 = vpack.c.bf16 %v259, %v258
        %v271 = vpack.c.bf16 %v261, %v260
        %v272 = vpack.c.bf16 %v263, %v262
        %v273 = vpack.c.bf16 %v265, %v264
        %v274 = vld [vmem:[%s1] sm:$0xf]
        %v275 = vld [vmem:[%s1 + $0x4] sm:$0xf]
        %v276 = vld [vmem:[%s1 + $0x8] sm:$0xf]
        %v277 = vld [vmem:[%s1 + $0xc] sm:$0xf]
        %v278 = vld [vmem:[%s1 + $0x10] sm:$0xf]
        %v279 = vld [vmem:[%s1 + $0x14] sm:$0xf]
        %v280 = vld [vmem:[%s1 + $0x18] sm:$0xf]
        %v281 = vld [vmem:[%s1 + $0x1c] sm:$0xf]
        %v290 = vunpack.c.l.b16 %v274
        %v291 = vunpack.c.l.b16 %v275
        %v292 = vunpack.c.l.b16 %v276
        %v293 = vunpack.c.l.b16 %v277
        %v294 = vunpack.c.l.b16 %v278
        %v295 = vunpack.c.l.b16 %v279
        %v296 = vunpack.c.l.b16 %v280
        %v297 = vunpack.c.l.b16 %v281
        %v298 = vpack.c.b16 %v291, %v290
        %v299 = vpack.c.b16 %v293, %v292
        %v300 = vpack.c.b16 %v295, %v294
        %v301 = vpack.c.b16 %v297, %v296
        %vm306 = vcmask 523264
        %v308 = vsel %vm306, %v266, 0
        %v311 = vsel %vm306, %v267, 0
        %v314 = vsel %vm306, %v268, 0
        %v317 = vsel %vm306, %v269, 0
        %v320 = vsel %vm306, %v270, 0
        %v323 = vsel %vm306, %v271, 0
        %v326 = vsel %vm306, %v272, 0
        %v329 = vsel %vm306, %v273, 0
        %331 = vmatpush.bf16.msra.mxu0 0
        %332 = vmatpush.bf16.msra.mxu0 0
        %333 = vmatpush.bf16.msra.mxu0 0
        %334 = vmatpush.bf16.msra.mxu0 0
        %335 = vmatpush.bf16.msra.mxu0 %v301
        %336 = vmatpush.bf16.msra.mxu0 %v300
        %337 = vmatpush.bf16.msra.mxu0 %v299
        %338 = vmatpush.bf16.msra.mxu0 %v298
        %339 = vmatmul.bf16.gmra.mxu0 %v308
        %v340 = vpop.f32.mrf.mxu0
        %v341 = vadd.f32 0.0, %v340
        %v342 = vpop.f32.mrf.mxu0
        %v343 = vadd.f32 0.0, %v342
        %344 = vmatmul.bf16.gmra.mxu0 %v311
        %v345 = vpop.f32.mrf.mxu0
        %v346 = vadd.f32 0.0, %v345
        %v347 = vpop.f32.mrf.mxu0
        %v348 = vadd.f32 0.0, %v347
        %349 = vmatmul.bf16.gmra.mxu0 %v314
        %v350 = vpop.f32.mrf.mxu0
        %v351 = vadd.f32 0.0, %v350
        %v352 = vpop.f32.mrf.mxu0
        %v353 = vadd.f32 0.0, %v352
        %354 = vmatmul.bf16.gmra.mxu0 %v317
        %v355 = vpop.f32.mrf.mxu0
        %v356 = vadd.f32 0.0, %v355
        %v357 = vpop.f32.mrf.mxu0
        %v358 = vadd.f32 0.0, %v357
        %359 = vmatmul.bf16.gmra.mxu0 %v320
        %v360 = vpop.f32.mrf.mxu0
        %v361 = vadd.f32 0.0, %v360
        %v362 = vpop.f32.mrf.mxu0
        %v363 = vadd.f32 0.0, %v362
        %364 = vmatmul.bf16.gmra.mxu0 %v323
        %v365 = vpop.f32.mrf.mxu0
        %v366 = vadd.f32 0.0, %v365
        %v367 = vpop.f32.mrf.mxu0
        %v368 = vadd.f32 0.0, %v367
        %369 = vmatmul.bf16.gmra.mxu0 %v326
        %v370 = vpop.f32.mrf.mxu0
        %v371 = vadd.f32 0.0, %v370
        %v372 = vpop.f32.mrf.mxu0
        %v373 = vadd.f32 0.0, %v372
        %374 = vmatmul.bf16.gmra.mxu0 %v329
        %v375 = vpop.f32.mrf.mxu0
        %v376 = vadd.f32 0.0, %v375
        %v377 = vpop.f32.mrf.mxu0
        %v378 = vadd.f32 0.0, %v377
        %379 = vdwg.mxu0
        %396 = vrot.lane.b32.xlu0 %v341, 95
        %v397 = vpop.permute.xlu0 %396
        %398 = vrot.lane.b32.xlu0 %v343, 95
        %v399 = vpop.permute.xlu0 %398
        %400 = vrot.lane.b32.xlu0 %v346, 95
        %v401 = vpop.permute.xlu0 %400
        %402 = vrot.lane.b32.xlu0 %v348, 95
        %v403 = vpop.permute.xlu0 %402
        %404 = vrot.lane.b32.xlu0 %v351, 95
        %v405 = vpop.permute.xlu0 %404
        %406 = vrot.lane.b32.xlu0 %v353, 95
        %v407 = vpop.permute.xlu0 %406
        %408 = vrot.lane.b32.xlu0 %v356, 95
        %v409 = vpop.permute.xlu0 %408
        %410 = vrot.lane.b32.xlu0 %v358, 95
        %v411 = vpop.permute.xlu0 %410
        %412 = vrot.lane.b32.xlu0 %v361, 95
        %v413 = vpop.permute.xlu0 %412
        %414 = vrot.lane.b32.xlu0 %v363, 95
        %v415 = vpop.permute.xlu0 %414
        %416 = vrot.lane.b32.xlu0 %v366, 95
        %v417 = vpop.permute.xlu0 %416
        %418 = vrot.lane.b32.xlu0 %v368, 95
        %v419 = vpop.permute.xlu0 %418
        %420 = vrot.lane.b32.xlu0 %v371, 95
        %v421 = vpop.permute.xlu0 %420
        %422 = vrot.lane.b32.xlu0 %v373, 95
        %v423 = vpop.permute.xlu0 %422
        %424 = vrot.lane.b32.xlu0 %v376, 95
        %v425 = vpop.permute.xlu0 %424
        %426 = vrot.lane.b32.xlu0 %v378, 95
        %v427 = vpop.permute.xlu0 %426
        %vm444 = vcmask 7168
        %445 = vst.msk [vmem:[%s247] sm:$0xff] %vm444, %v397
        %446 = vst.msk [vmem:[%s247 + $0x8] sm:$0xff] %vm444, %v399
        %447 = vst.msk [vmem:[%s247 + $0x10] sm:$0xff] %vm444, %v401
        %448 = vst.msk [vmem:[%s247 + $0x18] sm:$0xff] %vm444, %v403
        %449 = vst.msk [vmem:[%s247 + $0x20] sm:$0xff] %vm444, %v405
        %450 = vst.msk [vmem:[%s247 + $0x28] sm:$0xff] %vm444, %v407
        %451 = vst.msk [vmem:[%s247 + $0x30] sm:$0xff] %vm444, %v409
        %452 = vst.msk [vmem:[%s247 + $0x38] sm:$0xff] %vm444, %v411
        %453 = vst.msk [vmem:[%s247 + $0x40] sm:$0xff] %vm444, %v413
        %454 = vst.msk [vmem:[%s247 + $0x48] sm:$0xff] %vm444, %v415
        %455 = vst.msk [vmem:[%s247 + $0x50] sm:$0xff] %vm444, %v417
        %456 = vst.msk [vmem:[%s247 + $0x58] sm:$0xff] %vm444, %v419
        %457 = vst.msk [vmem:[%s247 + $0x60] sm:$0xff] %vm444, %v421
        %458 = vst.msk [vmem:[%s247 + $0x68] sm:$0xff] %vm444, %v423
        %459 = vst.msk [vmem:[%s247 + $0x70] sm:$0xff] %vm444, %v425
        %460 = vst.msk [vmem:[%s247 + $0x78] sm:$0xff] %vm444, %v427
        %v461 = vld [vmem:[%s2] sm:$0x1]
        %v463 = vsel %vm306, %v461, 0
        %465 = vmatpush.bf16.xpose.msra.mxu0 %v329
        %466 = vmatpush.bf16.xpose.msra.mxu0 %v326
        %467 = vmatpush.bf16.xpose.msra.mxu0 %v323
        %468 = vmatpush.bf16.xpose.msra.mxu0 %v320
        %469 = vmatpush.bf16.xpose.msra.mxu0 %v317
        %470 = vmatpush.bf16.xpose.msra.mxu0 %v314
        %471 = vmatpush.bf16.xpose.msra.mxu0 %v311
        %472 = vmatpush.bf16.xpose.msra.mxu0 %v308
        %473 = vmatmul.bf16.gmra.mxu0 %v463
        %v474 = vpop.f32.mrf.mxu0
        %v475 = vadd.f32 0.0, %v474
        %v476 = vpop.f32.mrf.mxu0
        %477 = vdwg.mxu0
        %478 = vst [vmem:[%s235] sm:$0x1] %v475
        %v479 = vlaneseq
        %v480 = vand.u32 %v479, 127
        %vm481 = vcmp.eq.s32.totalorder %v480, 32
        %v482 = vsel %vm481, 1.0, %v341
        %v483 = vsel %vm481, 1.0, %v343
        %v484 = vsel %vm481, 1.0, %v346
        %v485 = vsel %vm481, 1.0, %v348
        %v486 = vsel %vm481, 1.0, %v351
        %v487 = vsel %vm481, 1.0, %v353
        %v488 = vsel %vm481, 1.0, %v356
        %v489 = vsel %vm481, 1.0, %v358
        %v490 = vsel %vm481, 1.0, %v361
        %v491 = vsel %vm481, 1.0, %v363
        %v492 = vsel %vm481, 1.0, %v366
        %v493 = vsel %vm481, 1.0, %v368
        %v494 = vsel %vm481, 1.0, %v371
        %v495 = vsel %vm481, 1.0, %v373
        %v496 = vsel %vm481, 1.0, %v376
        %v497 = vsel %vm481, 1.0, %v378
        %v498 = vpack.c.bf16 %v482, %v482
        %v499 = vpack.c.bf16 %v483, %v483
        %v500 = vpack.c.bf16 %v484, %v484
        %v501 = vpack.c.bf16 %v485, %v485
        %v502 = vpack.c.bf16 %v486, %v486
        %v503 = vpack.c.bf16 %v487, %v487
        %v504 = vpack.c.bf16 %v488, %v488
        %v505 = vpack.c.bf16 %v489, %v489
        %v506 = vpack.c.bf16 %v490, %v490
        %v507 = vpack.c.bf16 %v491, %v491
        %v508 = vpack.c.bf16 %v492, %v492
        %v509 = vpack.c.bf16 %v493, %v493
        %v510 = vpack.c.bf16 %v494, %v494
        %v511 = vpack.c.bf16 %v495, %v495
        %v512 = vpack.c.bf16 %v496, %v496
        %v513 = vpack.c.bf16 %v497, %v497
        %514 = vst [vmem:[%s222] sm:$0xf] %v498
        %515 = vst [vmem:[%s222 + $0x4] sm:$0xf] %v499
        %516 = vst [vmem:[%s222 + $0x8] sm:$0xf] %v500
        %517 = vst [vmem:[%s222 + $0xc] sm:$0xf] %v501
        %518 = vst [vmem:[%s222 + $0x10] sm:$0xf] %v502
        %519 = vst [vmem:[%s222 + $0x14] sm:$0xf] %v503
        %520 = vst [vmem:[%s222 + $0x18] sm:$0xf] %v504
        %521 = vst [vmem:[%s222 + $0x1c] sm:$0xf] %v505
        %522 = vst [vmem:[%s222 + $0x20] sm:$0xf] %v506
        %523 = vst [vmem:[%s222 + $0x24] sm:$0xf] %v507
        %524 = vst [vmem:[%s222 + $0x28] sm:$0xf] %v508
        %525 = vst [vmem:[%s222 + $0x2c] sm:$0xf] %v509
        %526 = vst [vmem:[%s222 + $0x30] sm:$0xf] %v510
        %527 = vst [vmem:[%s222 + $0x34] sm:$0xf] %v511
        %528 = vst [vmem:[%s222 + $0x38] sm:$0xf] %v512
        %529 = vst [vmem:[%s222 + $0x3c] sm:$0xf] %v513
        %s530 = sand.u32 %s99, 1
        %s531 = scalar_lea.sflag [#allocation3], %s530
        %s532 = sand.u32 %s99, 1
        %s533 = smul.addr %s532, 64
        %s534 = scalar_lea.vmem [#allocation2], %s533
        %s535 = smul.u32 16, %s23
        %p536 = scmp.lt.s32.totalorder %s535, 31
        %s537 = scalar_select %p536, %s535, 31
        %s538 = smul.addr %s537, 8
        %s539 = scalar_lea.vmem %s4, %s538
        %s540 = sand.u32 %s151, 1
        %s541 = scalar_lea.sflag [#allocation5], %s540
        %s542 = sand.u32 %s151, 1
        %s543 = scalar_lea.vmem [#allocation4], %s542
        // Predicated region
        $region33: #{tpu_custom_call.1} parent=31 // pred_check
          %p544 = pneg %p109
        $region34: #{tpu_custom_call.1} parent=31 // pred_check_branch
          %546 = sbr.rel (%p544) target = $region36
        $region35: #{tpu_custom_call.1} parent=31 // pred_region
          %s547 = smul.u32 16, %s23
          %549 = vsyncadd %s531, 0
          %s550 = smul.addr %s547, 4
          %s551 = scalar_lea.hbm %s3, %s550
          %s552 = sshll.u32 %s534, 4
          %s553 = int_to_ptr.vmem [resolvable:$true] %s552
          %s554 = sshll.u32 %s551, 4
          %s555 = int_to_ptr.hbm [resolvable:$true] %s554
          %560 = dma.vmem_to_hbm [thread:$0]  %s553, 1024, %s555, %s531, 64, 64, 4
        $region36: #{tpu_custom_call.1} parent=31 // pred_fallthru
          _
        // Predicated region
        $region37: #{tpu_custom_call.1} parent=31 // pred_check
          %p561 = pneg %p135
        $region38: #{tpu_custom_call.1} parent=31 // pred_check_branch
          %563 = sbr.rel (%p561) target = $region40
        $region39: #{tpu_custom_call.1} parent=31 // pred_region
          %s564 = smul.u32 16, %s23
        $region40: #{tpu_custom_call.1} parent=31 // pred_fallthru
          _
        // Predicated region
        $region41: #{tpu_custom_call.1} parent=31 // pred_check
          %p565 = pneg %p161
        $region42: #{tpu_custom_call.1} parent=31 // pred_check_branch
          %567 = sbr.rel (%p565) target = $region44
        $region43: #{tpu_custom_call.1} parent=31 // pred_region
          %569 = vsyncadd %s541, 0
          %s570 = scalar_lea.hbm %s5, %s23
          %s572 = sshll.u32 %s543, 4
          %s573 = int_to_ptr.vmem [resolvable:$true] %s572
          %s574 = sshll.u32 %s570, 4
          %s575 = int_to_ptr.hbm [resolvable:$true] %s574
          %577 = dma.vmem_to_hbm [thread:$0]  %s573, 16, %s575, %s541
        $region44: #{tpu_custom_call.1} parent=31 // pred_fallthru
          _
      $region32: #{tpu_custom_call.1} parent=5 // pred_fallthru
        _
      %p578 = scmp.le.s32.totalorder 2, %s18
      // Predicated region
      $region45: #{tpu_custom_call.1} parent=5 // pred_check
        %p579 = pneg %p578
      $region46: #{tpu_custom_call.1} parent=5 // pred_check_branch
        %581 = sbr.rel (%p579) target = $region48
      $region47: #{tpu_custom_call.1} parent=5 // pred_region
        %s582 = ssub.s32 %s18, 2
        // Predicated region
        $region49: #{tpu_custom_call.1} parent=47 // pred_check
          %p583 = pneg %p115
        $region50: #{tpu_custom_call.1} parent=47 // pred_check_branch
          %585 = sbr.rel (%p583) target = $region52
        $region51: #{tpu_custom_call.1} parent=47 // pred_region
          %s586 = sand.u32 %s100, 1
          %s587 = scalar_lea.sflag [#allocation3], %s586
          %s588 = sand.u32 %s100, 1
          %s589 = smul.addr %s588, 64
          %s590 = scalar_lea.vmem [#allocation2], %s589
          %592 = dma.done %s587, 1024
        $region52: #{tpu_custom_call.1} parent=47 // pred_fallthru
          _
        // Predicated region
        $region53: #{tpu_custom_call.1} parent=47 // pred_check
          %p593 = pneg %p141
        $region54: #{tpu_custom_call.1} parent=47 // pred_check_branch
          %595 = sbr.rel (%p593) target = $region56
        $region55: #{tpu_custom_call.1} parent=47 // pred_region
          %s596 = smul.u32 16, %s24
          %p597 = scmp.lt.s32.totalorder %s596, 31
          %s598 = scalar_select %p597, %s596, 31
          %s599 = smul.addr %s598, 8
          %s600 = scalar_lea.vmem %s4, %s599
        $region56: #{tpu_custom_call.1} parent=47 // pred_fallthru
          _
        // Predicated region
        $region57: #{tpu_custom_call.1} parent=47 // pred_check
          %p601 = pneg %p167
        $region58: #{tpu_custom_call.1} parent=47 // pred_check_branch
          %603 = sbr.rel (%p601) target = $region60
        $region59: #{tpu_custom_call.1} parent=47 // pred_region
          %s604 = sand.u32 %s152, 1
          %s605 = scalar_lea.sflag [#allocation5], %s604
          %s606 = sand.u32 %s152, 1
          %s607 = scalar_lea.vmem [#allocation4], %s606
          %609 = dma.done %s605, 16
        $region60: #{tpu_custom_call.1} parent=47 // pred_fallthru
          _
      $region48: #{tpu_custom_call.1} parent=5 // pred_fallthru
        _
    $region6: #{tpu_custom_call.1} parent=1 // loop_footer
      %s22 = sadd.s32 1, %s18
    $region7: #{tpu_custom_call.1} parent=1 // loop_footer_branch
      %17 = sbr.rel target = $region3
    $region8: #{tpu_custom_call.1} parent=1 // loop_exit
      _
    %610 = vsyncpa [#allocation3], 1
    %s611 = scalar_lea.sflag [#allocation3], 1
    %612 = vsyncpa %s611, 1
    %613 = vsyncpa [#allocation5], 1
    %s614 = scalar_lea.sflag [#allocation5], 1
    %615 = vsyncpa %s614, 1

</llo_original>
